<compile_context>
chip_gen: v7x
topology: tpu7x:2x2x1
jax: 0.10.0
libtpu: 0.0.40
codegen_flags: <defaults>
</compile_context>

<pallas_src>
import functools

import jax
import jax.numpy as jnp
from jax.experimental import pallas as pl
from jax.experimental.pallas import tpu as pltpu


def _envelope_kernel(x_ref, o_ref, *, p, a, b, c):
    # Compute in f32 regardless of storage dtype.
    x = x_ref[...].astype(jnp.float32)
    # EUP approximate reciprocal + one Newton-Raphson refinement:
    # rel. error ~ (2^-12)^2 ~ 6e-8, i.e. full f32-class accuracy, while the
    # hard part runs in the EUP slot (free w.r.t. the 4-wide VALU).
    r = pl.reciprocal(x, approx=True)
    r = r * (2.0 - x * r)
    # Horner form: 1/x + x^(p-1) * (a + x*(b + c*x)); p-1 is a static Python
    # int so x**(p-1) lowers to lax.integer_pow (unrolled VPU multiplies).
    poly = a + x * (b + c * x)
    o_ref[...] = (r + (x ** (p - 1)) * poly).astype(o_ref.dtype)


def _envelope_formula(x, p, a, b, c):
    # Plain-JAX epilogue for the (<lanes)-element ragged tail.
    return 1.0 / x + (x ** (p - 1)) * (a + x * (b + c * x))


def _round_up(v, m):
    return ((v + m - 1) // m) * m


@functools.partial(jax.jit, static_argnums=(1, 2, 3))
def envelope(x, exponent, block_rows=2048, lanes=512):
    """Applies the Envelope forward pass elementwise to an arbitrary-shape x."""
    p = exponent + 1
    a = -(p + 1) * (p + 2) / 2.0
    b = float(p * (p + 2))
    c = -p * (p + 1) / 2.0

    orig_shape = x.shape
    total = x.size
    if total == 0:
        return x

    x_flat = x.reshape(-1)
    main = (total // lanes) * lanes      # largest lane-dense prefix
    rows = main // lanes

    kernel = functools.partial(_envelope_kernel, p=p, a=a, b=b, c=c)
    outs = []

    if rows > 0:
        # Sublane granularity depends on dtype packing (f32: 8, bf16: 16, i8: 32).
        sub = {4: 8, 2: 16, 1: 32}.get(x.dtype.itemsize, 8)
        if rows <= 2 * sub:
            # Tiny input: one block exactly equal to the full extent
            # (no padded/garbage rows at all).
            br = rows
        else:
            # Cap at block_rows (4 MiB/buffer at the f32 defaults) but also
            # guarantee >= 2 grid steps so both v7x TensorCores get work.
            br = min(_round_up(block_rows, sub),
                     _round_up(pl.cdiv(rows, 2), sub))
        grid = (pl.cdiv(rows, br),)      # ragged last block: reads padded with
                                         # garbage (discarded), writes masked.
        x2d = x_flat[:main].reshape(rows, lanes)
        n_main = rows * lanes

        main_out = pl.pallas_call(
            kernel,
            out_shape=jax.ShapeDtypeStruct((rows, lanes), x.dtype),
            grid_spec=pl.GridSpec(
                grid=grid,
                in_specs=[pl.BlockSpec((br, lanes), lambda i: (i, 0))],
                out_specs=pl.BlockSpec((br, lanes), lambda i: (i, 0)),
            ),
            compiler_params=pltpu.CompilerParams(
                dimension_semantics=("parallel",),
                vmem_limit_bytes=32 * 1024 * 1024,
            ),
            cost_estimate=pl.CostEstimate(
                flops=13 * n_main,
                transcendentals=n_main,
                bytes_accessed=2 * n_main * x.dtype.itemsize,
            ),
        )(x2d)
        outs.append(main_out.reshape(-1))

    if main < total:
        # < lanes leftover elements: negligible jnp epilogue (avoids any
        # padded HBM copy of the full array).
        xt = x_flat[main:].astype(jnp.float32)
        outs.append(_envelope_formula(xt, p, a, b, c).astype(x.dtype))

    out_flat = outs[0] if len(outs) == 1 else jnp.concatenate(outs)
    return out_flat.reshape(orig_shape)


def envelope_ref(x, exponent):
    # Literal transcription of the PyTorch forward (non-Horner) as the oracle.
    p = exponent + 1
    a = -(p + 1) * (p + 2) / 2.0
    b = p * (p + 2) * 1.0
    c = -p * (p + 1) / 2.0
    x_pow_p0 = x ** (p - 1)
    x_pow_p1 = x_pow_p0 * x
    x_pow_p2 = x_pow_p1 * x
    return 1.0 / x + a * x_pow_p0 + b * x_pow_p1 + c * x_pow_p2


if __name__ == "__main__":
    key = jax.random.PRNGKey(0)
    exponent = 5  # DimeNet default -> p = 6

    # Typical use: x is a scaled distance in (0, 1]. Keep it away from 0 so
    # 1/x stays well-conditioned for the correctness check.
    x = jax.random.uniform(
        key, (2, 4, 16, 16), dtype=jnp.float32, minval=0.05, maxval=1.0
    )
    out = jax.block_until_ready(envelope(x, exponent))
    ref = envelope_ref(x, exponent)
    assert out.shape == x.shape and out.dtype == x.dtype
    # Horner + refined-reciprocal vs. naive evaluation differ by a few f32
    # ULPs of the largest intermediate (~|b| * eps ~ 6e-6) near x -> 1.
    assert jnp.allclose(out, ref, rtol=1e-5, atol=5e-5), "mismatch vs reference"

    # Ragged size: exercises the no-padding main path + tiny jnp tail epilogue.
    x2 = jax.random.uniform(
        key, (8, 100, 3), dtype=jnp.float32, minval=0.05, maxval=1.0
    )
    out2 = jax.block_until_ready(envelope(x2, exponent))
    assert jnp.allclose(out2, envelope_ref(x2, exponent), rtol=1e-5, atol=5e-5)

    print("KERNEL_OK")
</pallas_src>

<mosaic_0001>
module attributes {stable_mosaic.version = 11 : i64} {
  func.func @_envelope_kernel(%arg0: i32, %arg1: memref<4x512xf32, #tpu.memory_space<vmem>>, %arg2: memref<4x512xf32, #tpu.memory_space<vmem>>) attributes {dimension_semantics = [#tpu.dimension_semantics<parallel>], iteration_bounds = array<i64: 1>, scalar_prefetch = 0 : i64, scratch_operands = 0 : i64, tpu.core_type = #tpu.core_type<tc>, window_params = [{transform_indices = @transform_0, window_bounds = array<i64: 4, 512>}, {transform_indices = @transform_1, window_bounds = array<i64: 4, 512>}]} {
    %c0 = arith.constant 0 : index
    %c0_0 = arith.constant 0 : index
    %0 = vector.load %arg1[%c0, %c0_0] : memref<4x512xf32, #tpu.memory_space<vmem>>, vector<4x512xf32>
    %1 = tpu.reciprocal %0 {approx = true} : vector<4x512xf32> -> vector<4x512xf32>
    %2 = arith.mulf %0, %1 : vector<4x512xf32>
    %cst = arith.constant 2.000000e+00 : f32
    %3 = vector.broadcast %cst : f32 to vector<4x512xf32>
    %4 = arith.subf %3, %2 : vector<4x512xf32>
    %5 = arith.mulf %1, %4 : vector<4x512xf32>
    %cst_1 = arith.constant -2.100000e+01 : f32
    %6 = vector.broadcast %cst_1 : f32 to vector<4x512xf32>
    %7 = arith.mulf %6, %0 : vector<4x512xf32>
    %cst_2 = arith.constant 4.800000e+01 : f32
    %8 = vector.broadcast %cst_2 : f32 to vector<4x512xf32>
    %9 = arith.addf %8, %7 : vector<4x512xf32>
    %10 = arith.mulf %0, %9 : vector<4x512xf32>
    %cst_3 = arith.constant -2.800000e+01 : f32
    %11 = vector.broadcast %cst_3 : f32 to vector<4x512xf32>
    %12 = arith.addf %11, %10 : vector<4x512xf32>
    %13 = arith.mulf %0, %0 : vector<4x512xf32>
    %14 = arith.mulf %13, %13 : vector<4x512xf32>
    %15 = arith.mulf %0, %14 : vector<4x512xf32>
    %16 = arith.mulf %15, %12 : vector<4x512xf32>
    %17 = arith.addf %5, %16 : vector<4x512xf32>
    %c0_4 = arith.constant 0 : index
    %c0_5 = arith.constant 0 : index
    %18 = vector.load %arg2[%c0_4, %c0_5] : memref<4x512xf32, #tpu.memory_space<vmem>>, vector<4x512xf32>
    tpu.vector_store %arg2[%c0_4, %c0_5], %17 {strides = array<i32>} : memref<4x512xf32, #tpu.memory_space<vmem>>, vector<4x512xf32>,
    return
  }
  func.func @transform_0(%arg0: i32) -> (i32, i32) {
    %c0_i32 = arith.constant 0 : i32
    %c0_i32_0 = arith.constant 0 : i32
    return %arg0, %c0_i32 : i32, i32
  }
  func.func @transform_1(%arg0: i32) -> (i32, i32) {
    %c0_i32 = arith.constant 0 : i32
    %c0_i32_0 = arith.constant 0 : i32
    return %arg0, %c0_i32 : i32, i32
  }
}

</mosaic_0001>

<llo_original>
// kernel: envelope.1
$region0: #{envelope.1}
  #allocation0 [shape = 'u32[]', space=smem, size = 0x4, offset = 0x4, fixed_abs, tag = 'smem constant byte address 0x4 - core index']
  #allocation1 [shape = 'u32[144,128]{1,0:T(1,128)}', space=vmem, size = 0x12000, scoped, tag = 'internal scratch']
  %s0 = inlined_call_operand.vmem [shape: f32[4,512], index: 0, kind: input, shape index: {}]
  %s1 = inlined_call_operand.vmem [shape: f32[4,512], index: 1, kind: output, shape index: {}]
  %s2 = sld [smem:[#allocation0]]
  $region14: #{envelope.1} parent=0
    _
  %s4 = ssub.s32 1, %s2
  %s5 = scalar_select 0, %s4, %s2
  // Predicated region
  $region2: #{envelope.1} parent=0 // pred_check
    _
  $region3: #{envelope.1} parent=0 // pred_check_branch
    %7 = sbr.rel (0) target = $region5
  $region4: #{envelope.1} parent=0 // pred_region
    _
  $region5: #{envelope.1} parent=0 // pred_fallthru
    _
  %v8 = vld [vmem:[%s0] sm:$0xff]
  %v9 = vld [vmem:[%s0 + $0x8] sm:$0xff]
  %v10 = vrcp.pop %v8
  %v11 = vrcp.pop %v9
  %v12 = vmul.f32 %v8, %v10
  %v13 = vmul.f32 %v9, %v11
  %v14 = vsub.f32 2.0, %v12
  %v15 = vsub.f32 2.0, %v13
  %v16 = vmul.f32 %v10, %v14
  %v17 = vmul.f32 %v11, %v15
  %v18 = vmul.f32 %v8, -21.0
  %v19 = vmul.f32 %v9, -21.0
  %v20 = vadd.f32 %v18, 48.0
  %v21 = vadd.f32 %v19, 48.0
  %v22 = vmul.f32 %v8, %v20
  %v23 = vmul.f32 %v9, %v21
  %v24 = vadd.f32 %v22, -28.0
  %v25 = vadd.f32 %v23, -28.0
  %v26 = vmul.f32 %v8, %v8
  %v27 = vmul.f32 %v9, %v9
  %v28 = vmul.f32 %v26, %v26
  %v29 = vmul.f32 %v27, %v27
  %v30 = vmul.f32 %v8, %v28
  %v31 = vmul.f32 %v9, %v29
  %v32 = vmul.f32 %v30, %v24
  %v33 = vmul.f32 %v31, %v25
  %v34 = vadd.f32 %v16, %v32
  %v35 = vadd.f32 %v17, %v33
  %36 = vst [vmem:[%s1] sm:$0xff] %v34
  %37 = vst [vmem:[%s1 + $0x8] sm:$0xff] %v35
  // Predicated region
  $region6: #{envelope.1} parent=0 // pred_check
    _
  $region7: #{envelope.1} parent=0 // pred_check_branch
    %39 = sbr.rel (0) target = $region9
  $region8: #{envelope.1} parent=0 // pred_region
    _
  $region9: #{envelope.1} parent=0 // pred_fallthru
    _
  // Predicated region
  $region10: #{envelope.1} parent=0 // pred_check
    _
  $region11: #{envelope.1} parent=0 // pred_check_branch
    %41 = sbr.rel (0) target = $region13
  $region12: #{envelope.1} parent=0 // pred_region
    _
  $region13: #{envelope.1} parent=0 // pred_fallthru
    _

</llo_original>
